<compile_context>
chip_gen: v7x
topology: tpu7x:2x2x1
jax: 0.10.0
libtpu: 0.0.40
codegen_flags: <defaults>
</compile_context>

<pallas_src>
import jax
import jax.numpy as jnp
from jax.experimental import pallas as pl
from jax.experimental.pallas import tpu as pltpu


def _round_up(x, m):
    return ((x + m - 1) // m) * m


def _tensorcores_per_chip():
    """Best-effort detection of TensorCores per chip (v7x has 2)."""
    try:
        kind = jax.devices()[0].device_kind.lower()
    except Exception:
        return 1
    return 2 if ("v7" in kind or "7x" in kind) else 1


def _discriminator_kernel(z_ref, w1_ref, b1_ref, w2_ref, b2_ref, w3_ref,
                          b3_ref, out_ref):
    """One batch tile. z arrives in natural (TM, latent) layout; activations
    are kept transposed, (features, TM), so the batch lives on the 128-lane
    axis and the output store is lane-dense."""
    # z tile: (TM, latent) f32 -> bf16 for the MXU (f32 accumulate).
    zb = z_ref[...].astype(jnp.bfloat16)

    # Layer 1: contract w1 (2h, latent) with z's last axis -> (2h, TM).
    # (Same "contract both last dims" pattern as flash-attention q@k^T.)
    h1 = jax.lax.dot_general(
        w1_ref[...], zb,
        dimension_numbers=(((1,), (1,)), ((), ())),
        preferred_element_type=jnp.float32)
    h1 = jnp.maximum(h1 + b1_ref[...], 0.0)

    # Layer 2: (h, 2h) @ (2h, TM) -> (h, TM), + bias, ReLU.
    h2 = jnp.dot(w2_ref[...], h1.astype(jnp.bfloat16),
                 preferred_element_type=jnp.float32)
    h2 = jnp.maximum(h2 + b2_ref[...], 0.0)

    # Layer 3 (output width 1): VPU multiply + sublane (XLU) reduce instead of
    # an M=1 MXU matmul. Scalar bias comes from SMEM.
    logits = jnp.sum(h2 * w3_ref[...], axis=0, keepdims=True) + b3_ref[0]

    # Sigmoid epilogue (exp runs on the otherwise-idle EUP slot).
    out_ref[...] = (1.0 / (1.0 + jnp.exp(-logits))).astype(out_ref.dtype)


def discriminator_forward(z, params, *, tm=4096):
    """Discriminator forward.  z: (batch, latent_dim) f32 -> (batch, 1) f32.

    tm is the batch tile (rounded up to a multiple of 128). The default 4096
    keeps per-step VMEM usage ~8 MiB (safe on every chip) while amortizing the
    per-grid-step pipeline overhead; on v7x the tile is additionally capped so
    the "parallel" batch grid yields >= 2 steps for the 2 TensorCores.
    """
    batch, latent_dim = z.shape
    two_h = params["w1"].shape[0]
    h_dim = params["w2"].shape[0]

    tm = max(128, _round_up(tm, 128))
    tile = min(tm, _round_up(batch, 128))

    # v7x (2 TC/chip): guarantee >= 2 grid steps so both cores get work.
    # On 1-TC chips extra steps are pure overhead, so keep the largest tile.
    if _tensorcores_per_chip() >= 2:
        half = _round_up(pl.cdiv(batch, 2), 128)
        tile = max(128, min(tile, half))

    grid = (pl.cdiv(batch, tile),)

    out_t = pl.pallas_call(
        _discriminator_kernel,
        out_shape=jax.ShapeDtypeStruct((1, batch), jnp.float32),
        grid=grid,
        in_specs=[
            # z in natural layout: contiguous (tile, latent) HBM slab per step.
            pl.BlockSpec((tile, latent_dim), lambda i: (i, 0)),
            pl.BlockSpec((two_h, latent_dim), lambda i: (0, 0)),  # w1 resident
            pl.BlockSpec((two_h, 1), lambda i: (0, 0)),           # b1 resident
            pl.BlockSpec((h_dim, two_h), lambda i: (0, 0)),       # w2 resident
            pl.BlockSpec((h_dim, 1), lambda i: (0, 0)),           # b2 resident
            pl.BlockSpec((h_dim, 1), lambda i: (0, 0)),           # w3 column
            pl.BlockSpec(memory_space=pltpu.MemorySpace.SMEM),    # b3 scalar
        ],
        out_specs=pl.BlockSpec((1, tile), lambda i: (0, i)),      # lane-dense
        compiler_params=pltpu.CompilerParams(
            dimension_semantics=("parallel",),
            vmem_limit_bytes=32 * 1024 * 1024),
    )(z, params["w1"], params["b1"], params["w2"], params["b2"],
      params["w3"], params["b3"])

    return out_t[0].reshape(batch, 1)


def init_params(key, latent_dim, h_dim):
    """Deterministic init, PyTorch-like scale. Weights kept in torch (out, in)
    layout; matmul weights stored in bf16, biases / last-layer column in f32."""
    ks = jax.random.split(key, 6)

    def lin(kw, kb, fan_in, fan_out):
        bound = 1.0 / float(fan_in) ** 0.5
        w = jax.random.uniform(kw, (fan_out, fan_in), jnp.float32,
                               minval=-bound, maxval=bound)
        b = jax.random.uniform(kb, (fan_out, 1), jnp.float32,
                               minval=-bound, maxval=bound)
        return w, b

    w1, b1 = lin(ks[0], ks[1], latent_dim, 2 * h_dim)
    w2, b2 = lin(ks[2], ks[3], 2 * h_dim, h_dim)
    w3, b3 = lin(ks[4], ks[5], h_dim, 1)
    return {
        "w1": w1.astype(jnp.bfloat16),   # (2h, latent)
        "b1": b1,                        # (2h, 1) f32
        "w2": w2.astype(jnp.bfloat16),   # (h, 2h)
        "b2": b2,                        # (h, 1) f32
        "w3": w3.T,                      # (h, 1) f32 column for the reduce
        "b3": b3.reshape(1),             # (1,) f32 scalar (SMEM)
    }


def reference_forward(z, p):
    """Pure-JAX reference with the same precision policy as the kernel."""
    zb = z.astype(jnp.bfloat16)
    h1 = jnp.maximum(
        jax.lax.dot_general(p["w1"], zb, (((1,), (1,)), ((), ())),
                            preferred_element_type=jnp.float32) + p["b1"], 0.0)
    h2 = jnp.maximum(
        jnp.dot(p["w2"], h1.astype(jnp.bfloat16),
                preferred_element_type=jnp.float32) + p["b2"], 0.0)
    logits = jnp.sum(h2 * p["w3"], axis=0, keepdims=True) + p["b3"]
    return (1.0 / (1.0 + jnp.exp(-logits))).T


if __name__ == "__main__":
    latent_dim = 8   # gl.get_value('latent_dim')
    h_dim = 32       # gl.get_value('h_dim')

    key = jax.random.PRNGKey(0)
    k_z, k_z2, k_p = jax.random.split(key, 3)
    params = init_params(k_p, latent_dim, h_dim)

    # Small demo batch (matches the toy spec).
    z = jax.random.normal(k_z, (2, latent_dim), dtype=jnp.float32)
    out = jax.block_until_ready(discriminator_forward(z, params))
    ref = reference_forward(z, params)
    assert out.shape == (2, 1)
    assert jnp.allclose(out, ref, atol=2e-5, rtol=2e-5)

    # Ragged batch with a small tile to exercise the multi-step batch grid
    # (resident weights, ragged last block, lane-dense stores).
    z2 = jax.random.normal(k_z2, (260, latent_dim), dtype=jnp.float32)
    ref2 = reference_forward(z2, params)
    out2 = jax.block_until_ready(discriminator_forward(z2, params, tm=128))
    assert out2.shape == (260, 1)
    assert jnp.allclose(out2, ref2, atol=2e-5, rtol=2e-5)

    # Same ragged batch with the default (large) tile.
    out3 = jax.block_until_ready(discriminator_forward(z2, params))
    assert out3.shape == (260, 1)
    assert jnp.allclose(out3, ref2, atol=2e-5, rtol=2e-5)

    print("KERNEL_OK")
</pallas_src>

<mosaic_0001>
module attributes {stable_mosaic.version = 11 : i64} {
  func.func @_discriminator_kernel(%arg0: i32, %arg1: memref<128x8xf32, #tpu.memory_space<vmem>>, %arg2: memref<64x8xbf16, #tpu.memory_space<vmem>>, %arg3: memref<64x1xf32, #tpu.memory_space<vmem>>, %arg4: memref<32x64xbf16, #tpu.memory_space<vmem>>, %arg5: memref<32x1xf32, #tpu.memory_space<vmem>>, %arg6: memref<32x1xf32, #tpu.memory_space<vmem>>, %arg7: memref<1xf32, #tpu.memory_space<smem>>, %arg8: memref<1x128xf32, #tpu.memory_space<vmem>>) attributes {dimension_semantics = [#tpu.dimension_semantics<parallel>], iteration_bounds = array<i64: 1>, scalar_prefetch = 0 : i64, scratch_operands = 0 : i64, tpu.core_type = #tpu.core_type<tc>, window_params = [{transform_indices = @transform_0, window_bounds = array<i64: 128, 8>}, {pipeline_mode = #tpu.pipeline_mode<synchronous>, transform_indices = @transform_1, window_bounds = array<i64: 64, 8>}, {pipeline_mode = #tpu.pipeline_mode<synchronous>, transform_indices = @transform_2, window_bounds = array<i64: 64, 1>}, {pipeline_mode = #tpu.pipeline_mode<synchronous>, transform_indices = @transform_3, window_bounds = array<i64: 32, 64>}, {pipeline_mode = #tpu.pipeline_mode<synchronous>, transform_indices = @transform_4, window_bounds = array<i64: 32, 1>}, {pipeline_mode = #tpu.pipeline_mode<synchronous>, transform_indices = @transform_5, window_bounds = array<i64: 32, 1>}, {transform_indices = @transform_6, window_bounds = array<i64: 1>}, {transform_indices = @transform_7, window_bounds = array<i64: 1, 128>}]} {
    %c0 = arith.constant 0 : index
    %c0_0 = arith.constant 0 : index
    %0 = vector.load %arg1[%c0, %c0_0] : memref<128x8xf32, #tpu.memory_space<vmem>>, vector<128x8xf32>
    %1 = arith.truncf %0 : vector<128x8xf32> to vector<128x8xbf16>
    %c0_1 = arith.constant 0 : index
    %c0_2 = arith.constant 0 : index
    %2 = vector.load %arg2[%c0_1, %c0_2] : memref<64x8xbf16, #tpu.memory_space<vmem>>, vector<64x8xbf16>
    %cst = arith.constant dense<0.000000e+00> : vector<64x128xf32>
    %3 = tpu.matmul %2, %1, %cst {dimension_numbers = #tpu.dot_dimension_numbers<[1], [1], [0], [0], [0, 0, 1, 0], [], []>} : vector<64x8xbf16>, vector<128x8xbf16>, vector<64x128xf32> -> vector<64x128xf32>
    %c0_3 = arith.constant 0 : index
    %c0_4 = arith.constant 0 : index
    %4 = vector.load %arg3[%c0_3, %c0_4] : memref<64x1xf32, #tpu.memory_space<vmem>>, vector<64x1xf32>
    %5 = vector.broadcast %4 : vector<64x1xf32> to vector<64x128xf32>
    %6 = arith.addf %3, %5 : vector<64x128xf32>
    %cst_5 = arith.constant 0.000000e+00 : f32
    %7 = vector.broadcast %cst_5 : f32 to vector<64x128xf32>
    %8 = arith.maximumf %6, %7 : vector<64x128xf32>
    %c0_6 = arith.constant 0 : index
    %c0_7 = arith.constant 0 : index
    %9 = vector.load %arg4[%c0_6, %c0_7] : memref<32x64xbf16, #tpu.memory_space<vmem>>, vector<32x64xbf16>
    %10 = arith.truncf %8 : vector<64x128xf32> to vector<64x128xbf16>
    %cst_8 = arith.constant dense<0.000000e+00> : vector<32x128xf32>
    %11 = tpu.matmul %9, %10, %cst_8 {dimension_numbers = #tpu.dot_dimension_numbers<[1], [0], [0], [1], [0, 0, 1, 1], [], []>} : vector<32x64xbf16>, vector<64x128xbf16>, vector<32x128xf32> -> vector<32x128xf32>
    %c0_9 = arith.constant 0 : index
    %c0_10 = arith.constant 0 : index
    %12 = vector.load %arg5[%c0_9, %c0_10] : memref<32x1xf32, #tpu.memory_space<vmem>>, vector<32x1xf32>
    %13 = vector.broadcast %12 : vector<32x1xf32> to vector<32x128xf32>
    %14 = arith.addf %11, %13 : vector<32x128xf32>
    %cst_11 = arith.constant 0.000000e+00 : f32
    %15 = vector.broadcast %cst_11 : f32 to vector<32x128xf32>
    %16 = arith.maximumf %14, %15 : vector<32x128xf32>
    %c0_12 = arith.constant 0 : index
    %c0_13 = arith.constant 0 : index
    %17 = vector.load %arg6[%c0_12, %c0_13] : memref<32x1xf32, #tpu.memory_space<vmem>>, vector<32x1xf32>
    %18 = vector.broadcast %17 : vector<32x1xf32> to vector<32x128xf32>
    %19 = arith.mulf %16, %18 : vector<32x128xf32>
    %cst_14 = arith.constant dense<0.000000e+00> : vector<128xf32>
    %20 = vector.multi_reduction <add>, %19, %cst_14 [0] : vector<32x128xf32> to vector<128xf32>
    %21 = vector.shape_cast %20 : vector<128xf32> to vector<1x128xf32>
    %c0_15 = arith.constant 0 : index
    %22 = memref.load %arg7[%c0_15] : memref<1xf32, #tpu.memory_space<smem>>
    %23 = vector.broadcast %22 : f32 to vector<1x128xf32>
    %24 = arith.addf %21, %23 : vector<1x128xf32>
    %cst_16 = arith.constant 0.000000e+00 : f32
    %25 = vector.broadcast %cst_16 : f32 to vector<1x128xf32>
    %26 = arith.subf %25, %24 : vector<1x128xf32>
    %27 = math.exp %26 : vector<1x128xf32>
    %cst_17 = arith.constant 1.000000e+00 : f32
    %28 = vector.broadcast %cst_17 : f32 to vector<1x128xf32>
    %29 = arith.addf %28, %27 : vector<1x128xf32>
    %cst_18 = arith.constant 1.000000e+00 : f32
    %30 = vector.broadcast %cst_18 : f32 to vector<1x128xf32>
    %31 = arith.divf %30, %29 : vector<1x128xf32>
    %c0_19 = arith.constant 0 : index
    %c0_20 = arith.constant 0 : index
    %32 = vector.load %arg8[%c0_19, %c0_20] : memref<1x128xf32, #tpu.memory_space<vmem>>, vector<1x128xf32>
    tpu.vector_store %arg8[%c0_19, %c0_20], %31 {strides = array<i32>} : memref<1x128xf32, #tpu.memory_space<vmem>>, vector<1x128xf32>,
    return
  }
  func.func @transform_0(%arg0: i32) -> (i32, i32) {
    %c0_i32 = arith.constant 0 : i32
    %c0_i32_0 = arith.constant 0 : i32
    return %arg0, %c0_i32 : i32, i32
  }
  func.func @transform_1(%arg0: i32) -> (i32, i32) {
    %c0_i32 = arith.constant 0 : i32
    %c0_i32_0 = arith.constant 0 : i32
    %c0_i32_1 = arith.constant 0 : i32
    return %c0_i32, %c0_i32_0 : i32, i32
  }
  func.func @transform_2(%arg0: i32) -> (i32, i32) {
    %c0_i32 = arith.constant 0 : i32
    %c0_i32_0 = arith.constant 0 : i32
    %c0_i32_1 = arith.constant 0 : i32
    return %c0_i32, %c0_i32_0 : i32, i32
  }
  func.func @transform_3(%arg0: i32) -> (i32, i32) {
    %c0_i32 = arith.constant 0 : i32
    %c0_i32_0 = arith.constant 0 : i32
    %c0_i32_1 = arith.constant 0 : i32
    return %c0_i32, %c0_i32_0 : i32, i32
  }
  func.func @transform_4(%arg0: i32) -> (i32, i32) {
    %c0_i32 = arith.constant 0 : i32
    %c0_i32_0 = arith.constant 0 : i32
    %c0_i32_1 = arith.constant 0 : i32
    return %c0_i32, %c0_i32_0 : i32, i32
  }
  func.func @transform_5(%arg0: i32) -> (i32, i32) {
    %c0_i32 = arith.constant 0 : i32
    %c0_i32_0 = arith.constant 0 : i32
    %c0_i32_1 = arith.constant 0 : i32
    return %c0_i32, %c0_i32_0 : i32, i32
  }
  func.func @transform_6(%arg0: i32) -> i32 {
    %c0_i32 = arith.constant 0 : i32
    %c0_i32_0 = arith.constant 0 : i32
    return %c0_i32 : i32
  }
  func.func @transform_7(%arg0: i32) -> (i32, i32) {
    %c0_i32 = arith.constant 0 : i32
    %c0_i32_0 = arith.constant 0 : i32
    return %c0_i32, %arg0 : i32, i32
  }
}

</mosaic_0001>

<llo_original>
// kernel: tpu_custom_call.1
$region0: #{tpu_custom_call.1}
  #allocation0 [shape = 'u32[]', space=smem, size = 0x4, offset = 0x4, fixed_abs, tag = 'smem constant byte address 0x4 - core index']
  #allocation1 [shape = 'u32[144,128]{1,0:T(1,128)}', space=vmem, size = 0x12000, scoped, tag = 'internal scratch']
  #allocation2 [shape = 'f32[1]{0:T(128)S(6)}', space=smem, size = 0x200, scoped, tag = 'scoped memory for tpu_custom_call.1']
  %s0 = inlined_call_operand.vmem [shape: f32[2,8], index: 0, kind: input, shape index: {}]
  %s1 = inlined_call_operand.vmem [shape: bf16[64,8], index: 1, kind: input, shape index: {}]
  %s2 = inlined_call_operand.vmem [shape: f32[64,1], index: 2, kind: input, shape index: {}]
  %s3 = inlined_call_operand.vmem [shape: bf16[32,64], index: 3, kind: input, shape index: {}]
  %s4 = inlined_call_operand.vmem [shape: f32[32,1], index: 4, kind: input, shape index: {}]
  %s5 = inlined_call_operand.vmem [shape: f32[32,1], index: 5, kind: input, shape index: {}]
  %s6 = inlined_call_operand.<no memory space> [shape: f32[1], index: 6, kind: input, shape index: {}]
  %s7 = inlined_call_operand.hbm [shape: f32[1,2], index: 7, kind: output, shape index: {}]
  %s8 = sld [smem:[#allocation0]]
  $region38: #{tpu_custom_call.1} parent=0
    _
  %s10 = ssub.s32 1, %s8
  %s11 = scalar_select 0, %s10, %s8
  %12 = sst [smem:[#allocation2]] %s6
  $region1: #{tpu_custom_call.1} parent=0
    #allocation3 [shape = 'u8[512]{0}', space=vmem, size = 0x400, scoped, tag = 'output window, operand 0, single buffered']
    #allocation4 [shape = 's32[1]{0}', space=sflag, size = 0x4, scoped, tag = 'scoped memory for tpu_custom_call.1']
    %13 = vsyncpa [#allocation4], 0
    // Predicated region
    $region2: #{tpu_custom_call.1} parent=1 // pred_check
      _
    $region3: #{tpu_custom_call.1} parent=1 // pred_check_branch
      %15 = sbr.rel (0) target = $region5
    $region4: #{tpu_custom_call.1} parent=1 // pred_region
      _
    $region5: #{tpu_custom_call.1} parent=1 // pred_fallthru
      _
    // Predicated region
    $region6: #{tpu_custom_call.1} parent=1 // pred_check
      _
    $region7: #{tpu_custom_call.1} parent=1 // pred_check_branch
      %17 = sbr.rel (0) target = $region9
    $region8: #{tpu_custom_call.1} parent=1 // pred_region
      _
    $region9: #{tpu_custom_call.1} parent=1 // pred_fallthru
      _
    // Predicated region
    $region10: #{tpu_custom_call.1} parent=1 // pred_check
      _
    $region11: #{tpu_custom_call.1} parent=1 // pred_check_branch
      %19 = sbr.rel (0) target = $region13
    $region12: #{tpu_custom_call.1} parent=1 // pred_region
      _
    $region13: #{tpu_custom_call.1} parent=1 // pred_fallthru
      _
    // Predicated region
    $region14: #{tpu_custom_call.1} parent=1 // pred_check
      _
    $region15: #{tpu_custom_call.1} parent=1 // pred_check_branch
      %21 = sbr.rel (0) target = $region17
    $region16: #{tpu_custom_call.1} parent=1 // pred_region
      _
    $region17: #{tpu_custom_call.1} parent=1 // pred_fallthru
      _
    // Predicated region
    $region18: #{tpu_custom_call.1} parent=1 // pred_check
      _
    $region19: #{tpu_custom_call.1} parent=1 // pred_check_branch
      %23 = sbr.rel (0) target = $region21
    $region20: #{tpu_custom_call.1} parent=1 // pred_region
      _
    $region21: #{tpu_custom_call.1} parent=1 // pred_fallthru
      _
    // Predicated region
    $region22: #{tpu_custom_call.1} parent=1 // pred_check
      _
    $region23: #{tpu_custom_call.1} parent=1 // pred_check_branch
      %25 = sbr.rel (0) target = $region25
    $region24: #{tpu_custom_call.1} parent=1 // pred_region
      _
    $region25: #{tpu_custom_call.1} parent=1 // pred_fallthru
      _
    // Predicated region
    $region26: #{tpu_custom_call.1} parent=1 // pred_check
      _
    $region27: #{tpu_custom_call.1} parent=1 // pred_check_branch
      %27 = sbr.rel (0) target = $region29
    $region28: #{tpu_custom_call.1} parent=1 // pred_region
      _
    $region29: #{tpu_custom_call.1} parent=1 // pred_fallthru
      _
    %v29 = vld [vmem:[%s0] sm:$0xff]
    %v30 = vld [vmem:[%s0 + $0x8] sm:$0xff]
    %v31 = vld [vmem:[%s0 + $0x10] sm:$0xff]
    %v32 = vld [vmem:[%s0 + $0x18] sm:$0xff]
    %v33 = vld [vmem:[%s0 + $0x20] sm:$0xff]
    %v34 = vld [vmem:[%s0 + $0x28] sm:$0xff]
    %v35 = vld [vmem:[%s0 + $0x30] sm:$0xff]
    %v36 = vld [vmem:[%s0 + $0x38] sm:$0xff]
    %v37 = vld [vmem:[%s0 + $0x40] sm:$0xff]
    %v38 = vld [vmem:[%s0 + $0x48] sm:$0xff]
    %v39 = vld [vmem:[%s0 + $0x50] sm:$0xff]
    %v40 = vld [vmem:[%s0 + $0x58] sm:$0xff]
    %v41 = vld [vmem:[%s0 + $0x60] sm:$0xff]
    %v42 = vld [vmem:[%s0 + $0x68] sm:$0xff]
    %v43 = vld [vmem:[%s0 + $0x70] sm:$0xff]
    %v44 = vld [vmem:[%s0 + $0x78] sm:$0xff]
    %v45 = vpack.c.bf16 %v30, %v29
    %v46 = vpack.c.bf16 %v32, %v31
    %v47 = vpack.c.bf16 %v34, %v33
    %v48 = vpack.c.bf16 %v36, %v35
    %v49 = vpack.c.bf16 %v38, %v37
    %v50 = vpack.c.bf16 %v40, %v39
    %v51 = vpack.c.bf16 %v42, %v41
    %v52 = vpack.c.bf16 %v44, %v43
    %v53 = vld [vmem:[%s1] sm:$0xf]
    %v54 = vld [vmem:[%s1 + $0x4] sm:$0xf]
    %v55 = vld [vmem:[%s1 + $0x8] sm:$0xf]
    %v56 = vld [vmem:[%s1 + $0xc] sm:$0xf]
    %v57 = vld [vmem:[%s1 + $0x10] sm:$0xf]
    %v58 = vld [vmem:[%s1 + $0x14] sm:$0xf]
    %v59 = vld [vmem:[%s1 + $0x18] sm:$0xf]
    %v60 = vld [vmem:[%s1 + $0x1c] sm:$0xf]
    %v61 = vld [vmem:[%s2] sm:$0xff]
    %v62 = vld [vmem:[%s2 + $0x8] sm:$0xff]
    %v63 = vld [vmem:[%s2 + $0x10] sm:$0xff]
    %v64 = vld [vmem:[%s2 + $0x18] sm:$0xff]
    %v65 = vld [vmem:[%s2 + $0x20] sm:$0xff]
    %v66 = vld [vmem:[%s2 + $0x28] sm:$0xff]
    %v67 = vld [vmem:[%s2 + $0x30] sm:$0xff]
    %v68 = vld [vmem:[%s2 + $0x38] sm:$0xff]
    %70 = vset.pattern.permute.xlu0 0
    %71 = vperm.xlu0 %70, %v61
    %v72 = vpop.permute.xlu0 %71
    %75 = vset.pattern.permute.xlu0 0
    %76 = vperm.xlu0 %75, %v62
    %v77 = vpop.permute.xlu0 %76
    %80 = vset.pattern.permute.xlu0 0
    %81 = vperm.xlu0 %80, %v63
    %v82 = vpop.permute.xlu0 %81
    %85 = vset.pattern.permute.xlu0 0
    %86 = vperm.xlu0 %85, %v64
    %v87 = vpop.permute.xlu0 %86
    %90 = vset.pattern.permute.xlu0 0
    %91 = vperm.xlu0 %90, %v65
    %v92 = vpop.permute.xlu0 %91
    %95 = vset.pattern.permute.xlu0 0
    %96 = vperm.xlu0 %95, %v66
    %v97 = vpop.permute.xlu0 %96
    %100 = vset.pattern.permute.xlu0 0
    %101 = vperm.xlu0 %100, %v67
    %v102 = vpop.permute.xlu0 %101
    %105 = vset.pattern.permute.xlu0 0
    %106 = vperm.xlu0 %105, %v68
    %v107 = vpop.permute.xlu0 %106
    %v117 = vunpack.c.l.b16 %v53
    %v118 = vunpack.c.l.b16 %v54
    %v119 = vunpack.c.l.b16 %v55
    %v120 = vunpack.c.l.b16 %v56
    %v121 = vunpack.c.l.b16 %v57
    %v122 = vunpack.c.l.b16 %v58
    %v123 = vunpack.c.l.b16 %v59
    %v124 = vunpack.c.l.b16 %v60
    %v125 = vpack.c.b16 %v118, %v117
    %v126 = vpack.c.b16 %v120, %v119
    %v127 = vpack.c.b16 %v122, %v121
    %v128 = vpack.c.b16 %v124, %v123
    %vm129 = vcmask 64512
    %v131 = vsel %vm129, %v125, 0
    %v134 = vsel %vm129, %v126, 0
    %v137 = vsel %vm129, %v127, 0
    %v140 = vsel %vm129, %v128, 0
    %v143 = vsel %vm129, %v45, 0
    %v146 = vsel %vm129, %v46, 0
    %v149 = vsel %vm129, %v47, 0
    %v152 = vsel %vm129, %v48, 0
    %v155 = vsel %vm129, %v49, 0
    %v158 = vsel %vm129, %v50, 0
    %v161 = vsel %vm129, %v51, 0
    %v164 = vsel %vm129, %v52, 0
    %166 = vmatprep.subr.bf16.mxu0 0
    %167 = vmatpush1.bf16.xpose.msra.mxu0 %v143
    %168 = vmatprep.subr.bf16.mxu0 0
    %169 = vmatpush1.bf16.xpose.msra.mxu0 %v146
    %170 = vmatprep.subr.bf16.mxu0 0
    %171 = vmatpush1.bf16.xpose.msra.mxu0 %v149
    %172 = vmatprep.subr.bf16.mxu0 0
    %173 = vmatpush1.bf16.xpose.msra.mxu0 %v152
    %174 = vmatprep.subr.bf16.mxu0 0
    %175 = vmatpush1.bf16.xpose.msra.mxu0 %v155
    %176 = vmatprep.subr.bf16.mxu0 0
    %177 = vmatpush1.bf16.xpose.msra.mxu0 %v158
    %178 = vmatprep.subr.bf16.mxu0 0
    %179 = vmatpush1.bf16.xpose.msra.mxu0 %v161
    %180 = vmatprep.subr.bf16.mxu0 0
    %181 = vmatpush1.bf16.xpose.msra.mxu0 %v164
    %182 = vmatprep.subr.bf16.mxu0 0
    %183 = vmatpush1.bf16.xpose.msra.mxu0 0
    %184 = vmatprep.subr.bf16.mxu0 0
    %185 = vmatpush1.bf16.xpose.msra.mxu0 0
    %186 = vmatprep.subr.bf16.mxu0 0
    %187 = vmatpush1.bf16.xpose.msra.mxu0 0
    %188 = vmatprep.subr.bf16.mxu0 0
    %189 = vmatpush1.bf16.xpose.msra.mxu0 0
    %190 = vmatprep.subr.bf16.mxu0 0
    %191 = vmatpush1.bf16.xpose.msra.mxu0 0
    %192 = vmatprep.subr.bf16.mxu0 0
    %193 = vmatpush1.bf16.xpose.msra.mxu0 0
    %194 = vmatprep.subr.bf16.mxu0 0
    %195 = vmatpush1.bf16.xpose.msra.mxu0 0
    %196 = vmatprep.subr.bf16.mxu0 0
    %197 = vmatpush1.bf16.xpose.msra.mxu0 0
    %198 = vmatprep.mubr.bf16.mxu0 0
    %199 = vmatmul.mubr.bf16.gmra.mrb[0].mxu0 %v131
    %v200 = vpop.f32.mrb[0].mxu0
    %v201 = vadd.f32 %v72, %v200
    %v202 = vpop.f32.mrb[0].mxu0
    %v203 = vpop.f32.mrb[0].mxu0
    %v204 = vadd.f32 %v77, %v203
    %v205 = vpop.f32.mrb[0].mxu0
    %206 = vmatprep.mubr.bf16.mxu0 0
    %207 = vmatmul.mubr.bf16.gmra.mrb[0].mxu0 %v134
    %v208 = vpop.f32.mrb[0].mxu0
    %v209 = vadd.f32 %v82, %v208
    %v210 = vpop.f32.mrb[0].mxu0
    %v211 = vpop.f32.mrb[0].mxu0
    %v212 = vadd.f32 %v87, %v211
    %v213 = vpop.f32.mrb[0].mxu0
    %214 = vmatprep.mubr.bf16.mxu0 0
    %215 = vmatmul.mubr.bf16.gmra.mrb[0].mxu0 %v137
    %v216 = vpop.f32.mrb[0].mxu0
    %v217 = vadd.f32 %v92, %v216
    %v218 = vpop.f32.mrb[0].mxu0
    %v219 = vpop.f32.mrb[0].mxu0
    %v220 = vadd.f32 %v97, %v219
    %v221 = vpop.f32.mrb[0].mxu0
    %222 = vmatprep.mubr.bf16.mxu0 0
    %223 = vmatmul.mubr.bf16.gmra.mrb[0].mxu0 %v140
    %v224 = vpop.f32.mrb[0].mxu0
    %v225 = vadd.f32 %v102, %v224
    %v226 = vpop.f32.mrb[0].mxu0
    %v227 = vpop.f32.mrb[0].mxu0
    %v228 = vadd.f32 %v107, %v227
    %v229 = vpop.f32.mrb[0].mxu0
    %230 = vdwg.mxu0
    %v231 = vmax.f32 %v201, 0.0
    %v232 = vmax.f32 %v204, 0.0
    %v233 = vmax.f32 %v209, 0.0
    %v234 = vmax.f32 %v212, 0.0
    %v235 = vmax.f32 %v217, 0.0
    %v236 = vmax.f32 %v220, 0.0
    %v237 = vmax.f32 %v225, 0.0
    %v238 = vmax.f32 %v228, 0.0
    %v239 = vld [vmem:[%s3] sm:$0xf]
    %v240 = vld [vmem:[%s3 + $0x4] sm:$0xf]
    %v241 = vld [vmem:[%s3 + $0x8] sm:$0xf]
    %v242 = vld [vmem:[%s3 + $0xc] sm:$0xf]
    %v243 = vpack.c.bf16 %v232, %v231
    %v244 = vpack.c.bf16 %v234, %v233
    %v245 = vpack.c.bf16 %v236, %v235
    %v246 = vpack.c.bf16 %v238, %v237
    %v247 = vld [vmem:[%s4] sm:$0xff]
    %v248 = vld [vmem:[%s4 + $0x8] sm:$0xff]
    %v249 = vld [vmem:[%s4 + $0x10] sm:$0xff]
    %v250 = vld [vmem:[%s4 + $0x18] sm:$0xff]
    %252 = vset.pattern.permute.xlu0 0
    %253 = vperm.xlu0 %252, %v247
    %v254 = vpop.permute.xlu0 %253
    %257 = vset.pattern.permute.xlu0 0
    %258 = vperm.xlu0 %257, %v248
    %v259 = vpop.permute.xlu0 %258
    %262 = vset.pattern.permute.xlu0 0
    %263 = vperm.xlu0 %262, %v249
    %v264 = vpop.permute.xlu0 %263
    %267 = vset.pattern.permute.xlu0 0
    %268 = vperm.xlu0 %267, %v250
    %v269 = vpop.permute.xlu0 %268
    %v275 = vunpack.c.l.b16 %v239
    %v276 = vunpack.c.l.b16 %v240
    %v277 = vunpack.c.l.b16 %v241
    %v278 = vunpack.c.l.b16 %v242
    %v279 = vpack.c.b16 %v276, %v275
    %v280 = vpack.c.b16 %v278, %v277
    %vm281 = vcmask 523264
    %v283 = vsel %vm281, %v279, 0
    %v286 = vsel %vm281, %v280, 0
    %288 = vmatprep.subr.bf16.mxu0 0
    %289 = vmatpush1.bf16.msra.mxu0 %v243
    %290 = vmatprep.subr.bf16.mxu0 0
    %291 = vmatpush1.bf16.msra.mxu0 %v244
    %292 = vmatprep.subr.bf16.mxu0 0
    %293 = vmatpush1.bf16.msra.mxu0 %v245
    %294 = vmatprep.subr.bf16.mxu0 0
    %295 = vmatpush1.bf16.msra.mxu0 %v246
    %296 = vmatprep.subr.bf16.mxu0 0
    %297 = vmatpush1.bf16.msra.mxu0 0
    %298 = vmatprep.subr.bf16.mxu0 0
    %299 = vmatpush1.bf16.msra.mxu0 0
    %300 = vmatprep.subr.bf16.mxu0 0
    %301 = vmatpush1.bf16.msra.mxu0 0
    %302 = vmatprep.subr.bf16.mxu0 0
    %303 = vmatpush1.bf16.msra.mxu0 0
    %304 = vmatprep.subr.bf16.mxu0 0
    %305 = vmatpush1.bf16.msra.mxu0 0
    %306 = vmatprep.subr.bf16.mxu0 0
    %307 = vmatpush1.bf16.msra.mxu0 0
    %308 = vmatprep.subr.bf16.mxu0 0
    %309 = vmatpush1.bf16.msra.mxu0 0
    %310 = vmatprep.subr.bf16.mxu0 0
    %311 = vmatpush1.bf16.msra.mxu0 0
    %312 = vmatprep.subr.bf16.mxu0 0
    %313 = vmatpush1.bf16.msra.mxu0 0
    %314 = vmatprep.subr.bf16.mxu0 0
    %315 = vmatpush1.bf16.msra.mxu0 0
    %316 = vmatprep.subr.bf16.mxu0 0
    %317 = vmatpush1.bf16.msra.mxu0 0
    %318 = vmatprep.subr.bf16.mxu0 0
    %319 = vmatpush1.bf16.msra.mxu0 0
    %320 = vmatprep.mubr.bf16.mxu0 0
    %321 = vmatmul.mubr.bf16.gmra.mrb[0].mxu0 %v283
    %v322 = vpop.f32.mrb[0].mxu0
    %v323 = vadd.f32 %v254, %v322
    %v324 = vpop.f32.mrb[0].mxu0
    %v325 = vpop.f32.mrb[0].mxu0
    %v326 = vadd.f32 %v259, %v325
    %v327 = vpop.f32.mrb[0].mxu0
    %328 = vmatprep.mubr.bf16.mxu0 0
    %329 = vmatmul.mubr.bf16.gmra.mrb[0].mxu0 %v286
    %v330 = vpop.f32.mrb[0].mxu0
    %v331 = vadd.f32 %v264, %v330
    %v332 = vpop.f32.mrb[0].mxu0
    %v333 = vpop.f32.mrb[0].mxu0
    %v334 = vadd.f32 %v269, %v333
    %v335 = vpop.f32.mrb[0].mxu0
    %336 = vdwg.mxu0
    %v337 = vmax.f32 %v323, 0.0
    %v338 = vmax.f32 %v326, 0.0
    %v339 = vmax.f32 %v331, 0.0
    %v340 = vmax.f32 %v334, 0.0
    %v341 = vld [vmem:[%s5] sm:$0xff]
    %v342 = vld [vmem:[%s5 + $0x8] sm:$0xff]
    %v343 = vld [vmem:[%s5 + $0x10] sm:$0xff]
    %v344 = vld [vmem:[%s5 + $0x18] sm:$0xff]
    %346 = vset.pattern.permute.xlu0 0
    %347 = vperm.xlu0 %346, %v341
    %v348 = vpop.permute.xlu0 %347
    %351 = vset.pattern.permute.xlu0 0
    %352 = vperm.xlu0 %351, %v342
    %v353 = vpop.permute.xlu0 %352
    %356 = vset.pattern.permute.xlu0 0
    %357 = vperm.xlu0 %356, %v343
    %v358 = vpop.permute.xlu0 %357
    %361 = vset.pattern.permute.xlu0 0
    %362 = vperm.xlu0 %361, %v344
    %v363 = vpop.permute.xlu0 %362
    %v365 = vmul.f32 %v337, %v348
    %v366 = vmul.f32 %v338, %v353
    %v367 = vmul.f32 %v339, %v358
    %v368 = vmul.f32 %v340, %v363
    %v369 = vadd.f32 %v365, %v366
    %v370 = vadd.f32 %v369, %v367
    %v371 = vadd.f32 %v370, %v368
    %v372 = vrot.slane %v371, 4
    %v373 = vadd.f32 %v371, %v372
    %v374 = vrot.slane %v373, 2
    %v375 = vadd.f32 %v373, %v374
    %v376 = vrot.slane %v375, 1
    %v377 = vadd.f32 %v375, %v376
    %s378 = sld [smem:[#allocation2]]
    %v379 = vstv %s378
    %v380 = vadd.f32 %v377, %v379
    %v381 = vsub.f32 0.0, %v380
    %v382 = vmul.f32 %v381, 1.442695
    %v383 = vpow.pop %v382
    %v384 = vadd.f32 %v383, 1.0
    %v385 = vrcp.pop %v384
    %v386 = vmul.f32 1.0, %v385
    %387 = vst [vmem:[#allocation3] sm:$0x1] %v386
    // Predicated region
    $region30: #{tpu_custom_call.1} parent=1 // pred_check
      _
    $region31: #{tpu_custom_call.1} parent=1 // pred_check_branch
      %389 = sbr.rel (0) target = $region33
    $region32: #{tpu_custom_call.1} parent=1 // pred_region
      %s391 = ssub.s32 16, 16
      %392 = vsyncadd [#allocation4], %s391
      %s394 = sshll.u32 [#allocation3], 4
      %s395 = int_to_ptr.vmem [resolvable:$true] %s394
      %397 = dma.vmem_to_hbm [thread:$0]  %s395, 16, %s7, [#allocation4]
    $region33: #{tpu_custom_call.1} parent=1 // pred_fallthru
      _
    // Predicated region
    $region34: #{tpu_custom_call.1} parent=1 // pred_check
      _
    $region35: #{tpu_custom_call.1} parent=1 // pred_check_branch
      %399 = sbr.rel (0) target = $region37
    $region36: #{tpu_custom_call.1} parent=1 // pred_region
      %400 = dma.done [#allocation4], 16
    $region37: #{tpu_custom_call.1} parent=1 // pred_fallthru
      _
    %401 = vsyncpa [#allocation4], 1

</llo_original>
